<compile_context>
chip_gen: v5e
topology: v5e:2x2
jax: 0.10.0
libtpu: 0.0.40
codegen_flags: <defaults>
</compile_context>

<pallas_src>
import jax
import jax.numpy as jnp
from jax import lax
from jax.experimental import pallas as pl
from jax.experimental.pallas import tpu as pltpu

NUM_CLASSES = 4
FEAT_DIM = 2048
CLASS_PAD = 128          # lane-dense class dimension (multiple of 128)
NEG_INF = -1e30          # pad-class bias: exp(pad - max) == 0, max unaffected
MAX_TILE_B = 1024        # 1024 x 2048 bf16 = 4 MiB per streamed buffer


def rotation_head_kernel(feats_ref, w_ref, b_ref, gt_ref, out_ref):
    # feats_ref : [TILE_B, 2048] bf16      w_ref : [2048, 128] bf16
    # b_ref     : [1, 128] f32 (pad cols = -1e30)
    # gt_ref    : [TILE_B, 1] int32
    # out_ref   : [TILE_B, 128] f32 : cols 0..3 logits, col 4 per-example NLL
    logits = jnp.dot(feats_ref[...], w_ref[...], preferred_element_type=jnp.float32)
    logits = logits + b_ref[...]                      # broadcast bias over batch rows

    # Numerically stable per-row cross entropy (integer targets).
    # Pad columns carry logit ~ -1e30 -> exp(.) == 0, so max/LSE see only real classes.
    m = jnp.max(logits, axis=-1, keepdims=True)                        # [TILE_B, 1]
    lse = jnp.log(jnp.sum(jnp.exp(logits - m), axis=-1, keepdims=True)) + m
    classes = lax.broadcasted_iota(jnp.int32, logits.shape, 1)         # [TILE_B, 128]
    onehot = (classes == gt_ref[...]).astype(jnp.float32)              # gt in [0,4): pad cols never match
    target_logit = jnp.sum(logits * onehot, axis=-1, keepdims=True)    # [TILE_B, 1]
    nll = lse - target_logit                                           # [TILE_B, 1]

    # Single lane-dense output: overwrite pad lane NUM_CLASSES with the NLL.
    # Rows of the last tile beyond the true batch are discarded on write-back
    # (output array is exactly [B, 128]), so no explicit row mask is needed.
    out_ref[...] = jnp.where(classes == NUM_CLASSES, nll, logits)


def prepare_head_params(fc_w, fc_b, compute_dtype=jnp.bfloat16):
    """Pre-transpose + lane-pad the fc params once, outside the per-call path.
    fc_w: [4, 2048], fc_b: [4]  ->  w_pad [2048, 128] compute_dtype, b_pad [1, 128] f32."""
    c, f = fc_w.shape
    w_pad = jnp.zeros((f, CLASS_PAD), jnp.float32)
    w_pad = w_pad.at[:, :c].set(fc_w.T.astype(jnp.float32))
    b_pad = jnp.full((1, CLASS_PAD), NEG_INF, jnp.float32)
    b_pad = b_pad.at[0, :c].set(fc_b.astype(jnp.float32))
    return w_pad.astype(compute_dtype), b_pad


def _choose_tile_b(batch):
    # Whole batch if it fits one tile (block dim == full array dim is always
    # legal); otherwise 1024-row tiles (8-divisible, 4 MiB bf16 per buffer ->
    # comfortably double-buffered within every generation's scoped VMEM).
    return batch if batch <= MAX_TILE_B else MAX_TILE_B


def rotation_predictor_head(feats, w_pad, b_pad, gt, *, compute_dtype=jnp.bfloat16):
    """feats: [B, 2048]; w_pad: [2048, 128]; b_pad: [1, 128] f32; gt: [B] int.
    Returns (mean CE loss scalar, logits[B, NUM_CLASSES]) matching the training forward."""
    batch = feats.shape[0]
    tile_b = _choose_tile_b(batch)
    num_tiles = pl.cdiv(batch, tile_b)

    feats_c = feats.astype(compute_dtype)     # bf16 storage halves HBM traffic; f32 MXU accumulation
    gt2 = gt.reshape(batch, 1).astype(jnp.int32)

    bytes_accessed = (batch * FEAT_DIM * feats_c.dtype.itemsize       # feats read (dominant)
                      + FEAT_DIM * CLASS_PAD * w_pad.dtype.itemsize   # resident weight
                      + batch * CLASS_PAD * 4                          # padded logits+loss write
                      + batch * 4)                                     # gt read
    cost = pl.CostEstimate(
        flops=2 * batch * FEAT_DIM * CLASS_PAD,
        transcendentals=batch * CLASS_PAD,
        bytes_accessed=bytes_accessed,
    )

    out = pl.pallas_call(
        rotation_head_kernel,
        out_shape=jax.ShapeDtypeStruct((batch, CLASS_PAD), jnp.float32),
        grid_spec=pltpu.PrefetchScalarGridSpec(
            num_scalar_prefetch=0,
            grid=(num_tiles,),
            in_specs=[
                pl.BlockSpec((tile_b, FEAT_DIM), lambda i: (i, 0)),     # streamed / pipelined
                pl.BlockSpec((FEAT_DIM, CLASS_PAD), lambda i: (0, 0)),  # resident weight
                pl.BlockSpec((1, CLASS_PAD), lambda i: (0, 0)),         # resident bias
                pl.BlockSpec((tile_b, 1), lambda i: (i, 0)),            # labels
            ],
            out_specs=pl.BlockSpec((tile_b, CLASS_PAD), lambda i: (i, 0)),  # lane-dense output
        ),
        compiler_params=pltpu.CompilerParams(
            dimension_semantics=("parallel",),          # independent tiles -> v7x 2-TC sharding
            vmem_limit_bytes=32 * 1024 * 1024,          # explicit, portable across v5e/v6e/v7x
        ),
        cost_estimate=cost,
    )(feats_c, w_pad, b_pad, gt2)

    logits = out[:, :NUM_CLASSES]
    per_example = out[:, NUM_CLASSES]                   # NLL packed into pad lane 4
    loss = jnp.sum(per_example) / batch                 # mean over the true batch size
    return loss, logits


def synthetic_backbone(ims, proj_w, proj_b):
    # TODO(synk): the real backbone is an arbitrary externally supplied nn.Module;
    # this deterministic stand-in (global average pool + linear projection) just
    # produces a [B, 2048] feature map of the right shape.
    pooled = jnp.mean(ims, axis=(2, 3))                 # NCHW -> [B, C]
    return pooled @ proj_w + proj_b                     # [B, 2048]


def rotation_predictor_forward(ims, gt, params, training=True):
    feats = synthetic_backbone(ims, params["proj_w"], params["proj_b"])
    loss, pred = rotation_predictor_head(
        feats, params["fc_w_pad"], params["fc_b_pad"], gt)
    if not training:
        loss = None                                     # eval mode: module returns (None, logits)
    return loss, pred


def _reference_forward(ims, gt, params):
    feats = synthetic_backbone(ims, params["proj_w"], params["proj_b"])
    # Mirror the kernel's bf16 storage of activations/weights (f32 accumulation)
    # so the comparison isolates kernel correctness rather than cast error.
    f = feats.astype(jnp.bfloat16).astype(jnp.float32)
    w = params["fc_w"].astype(jnp.bfloat16).astype(jnp.float32)
    logits = f @ w.T + params["fc_b"].astype(jnp.float32)
    lse = jax.scipy.special.logsumexp(logits, axis=-1)
    tgt = jnp.take_along_axis(logits, gt[:, None], axis=-1)[:, 0]
    loss = jnp.mean(lse - tgt)
    return loss, logits


if __name__ == "__main__":
    key = jax.random.PRNGKey(0)
    k_im, k_gt, k_pw, k_pb, k_fw, k_fb = jax.random.split(key, 6)

    B, Cin, H, W = 2, 4, 16, 16
    ims = jax.random.normal(k_im, (B, Cin, H, W), dtype=jnp.float32)
    gt = jax.random.randint(k_gt, (B,), 0, NUM_CLASSES, dtype=jnp.int32)

    params = {
        "proj_w": 0.05 * jax.random.normal(k_pw, (Cin, FEAT_DIM), jnp.float32),
        "proj_b": 0.01 * jax.random.normal(k_pb, (FEAT_DIM,), jnp.float32),
        "fc_w": 0.02 * jax.random.normal(k_fw, (NUM_CLASSES, FEAT_DIM), jnp.float32),
        "fc_b": 0.01 * jax.random.normal(k_fb, (NUM_CLASSES,), jnp.float32),
    }
    # Hoisted out of the per-call path: pre-transposed + lane-padded fc params.
    params["fc_w_pad"], params["fc_b_pad"] = prepare_head_params(
        params["fc_w"], params["fc_b"])

    loss, pred = rotation_predictor_forward(ims, gt, params, training=True)
    loss = jax.block_until_ready(loss)
    pred = jax.block_until_ready(pred)

    ref_loss, ref_pred = _reference_forward(ims, gt, params)
    assert pred.shape == (B, NUM_CLASSES), "pred shape mismatch"
    assert jnp.allclose(pred, ref_pred, atol=1e-4, rtol=1e-4), "logits mismatch"
    assert jnp.allclose(loss, ref_loss, atol=1e-4, rtol=1e-4), "loss mismatch"

    print("KERNEL_OK")
</pallas_src>

<mosaic_0001>
module attributes {stable_mosaic.version = 11 : i64} {
  func.func @rotation_head_kernel(%arg0: i32, %arg1: memref<2x2048xbf16, #tpu.memory_space<vmem>>, %arg2: memref<2048x128xbf16, #tpu.memory_space<vmem>>, %arg3: memref<1x128xf32, #tpu.memory_space<vmem>>, %arg4: memref<2x1xi32, #tpu.memory_space<vmem>>, %arg5: memref<2x128xf32, #tpu.memory_space<vmem>>) attributes {dimension_semantics = [#tpu.dimension_semantics<parallel>], iteration_bounds = array<i64: 1>, scalar_prefetch = 0 : i64, scratch_operands = 0 : i64, tpu.core_type = #tpu.core_type<tc>, window_params = [{transform_indices = @transform_0, window_bounds = array<i64: 2, 2048>}, {pipeline_mode = #tpu.pipeline_mode<synchronous>, transform_indices = @transform_1, window_bounds = array<i64: 2048, 128>}, {pipeline_mode = #tpu.pipeline_mode<synchronous>, transform_indices = @transform_2, window_bounds = array<i64: 1, 128>}, {transform_indices = @transform_3, window_bounds = array<i64: 2, 1>}, {transform_indices = @transform_4, window_bounds = array<i64: 2, 128>}]} {
    %c0 = arith.constant 0 : index
    %c0_0 = arith.constant 0 : index
    %0 = vector.load %arg1[%c0, %c0_0] : memref<2x2048xbf16, #tpu.memory_space<vmem>>, vector<2x2048xbf16>
    %c0_1 = arith.constant 0 : index
    %c0_2 = arith.constant 0 : index
    %1 = vector.load %arg2[%c0_1, %c0_2] : memref<2048x128xbf16, #tpu.memory_space<vmem>>, vector<2048x128xbf16>
    %cst = arith.constant dense<0.000000e+00> : vector<2x128xf32>
    %2 = tpu.matmul %0, %1, %cst {dimension_numbers = #tpu.dot_dimension_numbers<[1], [0], [0], [1], [0, 0, 1, 1], [], []>} : vector<2x2048xbf16>, vector<2048x128xbf16>, vector<2x128xf32> -> vector<2x128xf32>
    %c0_3 = arith.constant 0 : index
    %c0_4 = arith.constant 0 : index
    %3 = vector.load %arg3[%c0_3, %c0_4] : memref<1x128xf32, #tpu.memory_space<vmem>>, vector<1x128xf32>
    %4 = vector.broadcast %3 : vector<1x128xf32> to vector<2x128xf32>
    %5 = arith.addf %2, %4 : vector<2x128xf32>
    %cst_5 = arith.constant dense<0xFF800000> : vector<2xf32>
    %6 = vector.multi_reduction <maximumf>, %5, %cst_5 [1] : vector<2x128xf32> to vector<2xf32>
    %7 = vector.shape_cast %6 : vector<2xf32> to vector<2x1xf32>
    %8 = vector.broadcast %7 : vector<2x1xf32> to vector<2x128xf32>
    %9 = arith.subf %5, %8 : vector<2x128xf32>
    %10 = math.exp %9 : vector<2x128xf32>
    %cst_6 = arith.constant dense<0.000000e+00> : vector<2xf32>
    %11 = vector.multi_reduction <add>, %10, %cst_6 [1] : vector<2x128xf32> to vector<2xf32>
    %12 = vector.shape_cast %11 : vector<2xf32> to vector<2x1xf32>
    %13 = math.log %12 : vector<2x1xf32>
    %14 = arith.addf %13, %7 : vector<2x1xf32>
    %15 = tpu.iota {dimensions = array<i32: 1>} : vector<2x128xi32>
    %c0_7 = arith.constant 0 : index
    %c0_8 = arith.constant 0 : index
    %16 = vector.load %arg4[%c0_7, %c0_8] : memref<2x1xi32, #tpu.memory_space<vmem>>, vector<2x1xi32>
    %17 = vector.broadcast %16 : vector<2x1xi32> to vector<2x128xi32>
    %18 = arith.cmpi eq, %15, %17 : vector<2x128xi32>
    %19 = arith.extui %18 : vector<2x128xi1> to vector<2x128xi32>
    %20 = arith.sitofp %19 : vector<2x128xi32> to vector<2x128xf32>
    %21 = arith.mulf %5, %20 : vector<2x128xf32>
    %cst_9 = arith.constant dense<0.000000e+00> : vector<2xf32>
    %22 = vector.multi_reduction <add>, %21, %cst_9 [1] : vector<2x128xf32> to vector<2xf32>
    %23 = vector.shape_cast %22 : vector<2xf32> to vector<2x1xf32>
    %24 = arith.subf %14, %23 : vector<2x1xf32>
    %c4_i32 = arith.constant 4 : i32
    %25 = vector.broadcast %c4_i32 : i32 to vector<2x128xi32>
    %26 = arith.cmpi eq, %15, %25 : vector<2x128xi32>
    %27 = vector.shape_cast %24 : vector<2x1xf32> to vector<2x1xf32>
    %28 = vector.broadcast %27 : vector<2x1xf32> to vector<2x128xf32>
    %29 = arith.select %26, %28, %5 : vector<2x128xi1>, vector<2x128xf32>
    %c0_10 = arith.constant 0 : index
    %c0_11 = arith.constant 0 : index
    %30 = vector.load %arg5[%c0_10, %c0_11] : memref<2x128xf32, #tpu.memory_space<vmem>>, vector<2x128xf32>
    tpu.vector_store %arg5[%c0_10, %c0_11], %29 {strides = array<i32>} : memref<2x128xf32, #tpu.memory_space<vmem>>, vector<2x128xf32>,
    return
  }
  func.func @transform_0(%arg0: i32) -> (i32, i32) {
    %c0_i32 = arith.constant 0 : i32
    %c0_i32_0 = arith.constant 0 : i32
    return %arg0, %c0_i32 : i32, i32
  }
  func.func @transform_1(%arg0: i32) -> (i32, i32) {
    %c0_i32 = arith.constant 0 : i32
    %c0_i32_0 = arith.constant 0 : i32
    %c0_i32_1 = arith.constant 0 : i32
    return %c0_i32, %c0_i32_0 : i32, i32
  }
  func.func @transform_2(%arg0: i32) -> (i32, i32) {
    %c0_i32 = arith.constant 0 : i32
    %c0_i32_0 = arith.constant 0 : i32
    %c0_i32_1 = arith.constant 0 : i32
    return %c0_i32, %c0_i32_0 : i32, i32
  }
  func.func @transform_3(%arg0: i32) -> (i32, i32) {
    %c0_i32 = arith.constant 0 : i32
    %c0_i32_0 = arith.constant 0 : i32
    return %arg0, %c0_i32 : i32, i32
  }
  func.func @transform_4(%arg0: i32) -> (i32, i32) {
    %c0_i32 = arith.constant 0 : i32
    %c0_i32_0 = arith.constant 0 : i32
    return %arg0, %c0_i32 : i32, i32
  }
}

</mosaic_0001>

<llo_original>
// kernel: tpu_custom_call.1
$region0: #{tpu_custom_call.1}
  #allocation0 [shape = 'u32[]', space=smem, size = 0x4, offset = 0x4, fixed_abs, tag = 'smem constant byte address 0x4 - core index']
  #allocation1 [shape = 'u32[72,128]{1,0:T(1,128)}', space=vmem, size = 0x9000, scoped, tag = 'internal scratch']
  %s0 = inlined_call_operand.hbm [shape: bf16[2,2048], index: 0, kind: input, shape index: {}]
  %s1 = inlined_call_operand.hbm [shape: bf16[2048,128], index: 1, kind: input, shape index: {}]
  %s2 = inlined_call_operand.vmem [shape: f32[1,128], index: 2, kind: input, shape index: {}]
  %s3 = inlined_call_operand.vmem [shape: s32[2,1], index: 3, kind: input, shape index: {}]
  %s4 = inlined_call_operand.hbm [shape: f32[2,128], index: 4, kind: output, shape index: {}]
  %s5 = sld [smem:[#allocation0]]
  $region34: #{tpu_custom_call.1} parent=0
    _
  %s7 = ssub.s32 1, %s5
  %s8 = scalar_select 0, %s7, %s5
  $region1: #{tpu_custom_call.1} parent=0
    #allocation2 [shape = 'u8[8192]{0}', space=vmem, size = 0x2000, scoped, tag = 'input window, operand 0, single buffered']
    #allocation3 [shape = 's32[1]{0}', space=sflag, size = 0x4, scoped, tag = 'scoped memory for tpu_custom_call.1']
    #allocation4 [shape = 's32[1]{0}', space=sflag, size = 0x4, scoped, tag = 'scoped memory for tpu_custom_call.1']
    #allocation5 [shape = 'u8[524288]{0}', space=vmem, size = 0x80000, scoped, tag = 'input window, operand 1, single buffered']
    #allocation6 [shape = 's32[1]{0}', space=sflag, size = 0x4, scoped, tag = 'scoped memory for tpu_custom_call.1']
    #allocation7 [shape = 'u8[1024]{0}', space=vmem, size = 0x400, scoped, tag = 'output window, operand 0, single buffered']
    %9 = vsyncpa [#allocation3], 0
    %10 = vsyncpa [#allocation6], 0
    %11 = vsyncpa [#allocation4], 0
    // Predicated region
    $region2: #{tpu_custom_call.1} parent=1 // pred_check
      _
    $region3: #{tpu_custom_call.1} parent=1 // pred_check_branch
      %13 = sbr.rel (0) target = $region5
    $region4: #{tpu_custom_call.1} parent=1 // pred_region
      %15 = vsyncadd [#allocation3], 0
      %s17 = sshll.u32 %s0, 4
      %s18 = int_to_ptr.hbm [resolvable:$true] %s17
      %s19 = sshll.u32 [#allocation2], 4
      %s20 = int_to_ptr.vmem [resolvable:$true] %s19
      %22 = dma.hbm_to_vmem [thread:$0]  %s18, 256, %s20, [#allocation3]
    $region5: #{tpu_custom_call.1} parent=1 // pred_fallthru
      _
    // Predicated region
    $region6: #{tpu_custom_call.1} parent=1 // pred_check
      _
    $region7: #{tpu_custom_call.1} parent=1 // pred_check_branch
      %24 = sbr.rel (0) target = $region9
    $region8: #{tpu_custom_call.1} parent=1 // pred_region
      %26 = vsyncadd [#allocation6], 0
      %s27 = sshll.u32 %s1, 4
      %s28 = int_to_ptr.hbm [resolvable:$true] %s27
      %s29 = sshll.u32 [#allocation5], 4
      %s30 = int_to_ptr.vmem [resolvable:$true] %s29
      %35 = dma.hbm_to_vmem [thread:$0]  %s28, 16384, %s30, [#allocation6], 64, 64, 4
    $region9: #{tpu_custom_call.1} parent=1 // pred_fallthru
      _
    // Predicated region
    $region10: #{tpu_custom_call.1} parent=1 // pred_check
      _
    $region11: #{tpu_custom_call.1} parent=1 // pred_check_branch
      %37 = sbr.rel (0) target = $region13
    $region12: #{tpu_custom_call.1} parent=1 // pred_region
      _
    $region13: #{tpu_custom_call.1} parent=1 // pred_fallthru
      _
    // Predicated region
    $region14: #{tpu_custom_call.1} parent=1 // pred_check
      _
    $region15: #{tpu_custom_call.1} parent=1 // pred_check_branch
      %39 = sbr.rel (0) target = $region17
    $region16: #{tpu_custom_call.1} parent=1 // pred_region
      _
    $region17: #{tpu_custom_call.1} parent=1 // pred_fallthru
      _
    // Predicated region
    $region18: #{tpu_custom_call.1} parent=1 // pred_check
      _
    $region19: #{tpu_custom_call.1} parent=1 // pred_check_branch
      %41 = sbr.rel (0) target = $region21
    $region20: #{tpu_custom_call.1} parent=1 // pred_region
      %43 = dma.done [#allocation3], 256
    $region21: #{tpu_custom_call.1} parent=1 // pred_fallthru
      _
    // Predicated region
    $region22: #{tpu_custom_call.1} parent=1 // pred_check
      _
    $region23: #{tpu_custom_call.1} parent=1 // pred_check_branch
      %45 = sbr.rel (0) target = $region25
    $region24: #{tpu_custom_call.1} parent=1 // pred_region
      %47 = dma.done [#allocation6], 16384
    $region25: #{tpu_custom_call.1} parent=1 // pred_fallthru
      _
    %v48 = vld [vmem:[#allocation2] sm:$0xff]
    %v49 = vld [vmem:[#allocation2 + $0x8] sm:$0xff]
    %v50 = vld [vmem:[#allocation5] sm:$0xf]
    %v51 = vld [vmem:[#allocation5 + $0x4] sm:$0xf]
    %v52 = vld [vmem:[#allocation5 + $0x8] sm:$0xf]
    %v53 = vld [vmem:[#allocation5 + $0xc] sm:$0xf]
    %v54 = vld [vmem:[#allocation5 + $0x10] sm:$0xf]
    %v55 = vld [vmem:[#allocation5 + $0x14] sm:$0xf]
    %v56 = vld [vmem:[#allocation5 + $0x18] sm:$0xf]
    %v57 = vld [vmem:[#allocation5 + $0x1c] sm:$0xf]
    %v58 = vld [vmem:[#allocation5 + $0x20] sm:$0xf]
    %v59 = vld [vmem:[#allocation5 + $0x24] sm:$0xf]
    %v60 = vld [vmem:[#allocation5 + $0x28] sm:$0xf]
    %v61 = vld [vmem:[#allocation5 + $0x2c] sm:$0xf]
    %v62 = vld [vmem:[#allocation5 + $0x30] sm:$0xf]
    %v63 = vld [vmem:[#allocation5 + $0x34] sm:$0xf]
    %v64 = vld [vmem:[#allocation5 + $0x38] sm:$0xf]
    %v65 = vld [vmem:[#allocation5 + $0x3c] sm:$0xf]
    %v66 = vld [vmem:[#allocation5 + $0x40] sm:$0xf]
    %v67 = vld [vmem:[#allocation5 + $0x44] sm:$0xf]
    %v68 = vld [vmem:[#allocation5 + $0x48] sm:$0xf]
    %v69 = vld [vmem:[#allocation5 + $0x4c] sm:$0xf]
    %v70 = vld [vmem:[#allocation5 + $0x50] sm:$0xf]
    %v71 = vld [vmem:[#allocation5 + $0x54] sm:$0xf]
    %v72 = vld [vmem:[#allocation5 + $0x58] sm:$0xf]
    %v73 = vld [vmem:[#allocation5 + $0x5c] sm:$0xf]
    %v74 = vld [vmem:[#allocation5 + $0x60] sm:$0xf]
    %v75 = vld [vmem:[#allocation5 + $0x64] sm:$0xf]
    %v76 = vld [vmem:[#allocation5 + $0x68] sm:$0xf]
    %v77 = vld [vmem:[#allocation5 + $0x6c] sm:$0xf]
    %v78 = vld [vmem:[#allocation5 + $0x70] sm:$0xf]
    %v79 = vld [vmem:[#allocation5 + $0x74] sm:$0xf]
    %v80 = vld [vmem:[#allocation5 + $0x78] sm:$0xf]
    %v81 = vld [vmem:[#allocation5 + $0x7c] sm:$0xf]
    %v82 = vld [vmem:[#allocation5 + $0x80] sm:$0xf]
    %v83 = vld [vmem:[#allocation5 + $0x84] sm:$0xf]
    %v84 = vld [vmem:[#allocation5 + $0x88] sm:$0xf]
    %v85 = vld [vmem:[#allocation5 + $0x8c] sm:$0xf]
    %v86 = vld [vmem:[#allocation5 + $0x90] sm:$0xf]
    %v87 = vld [vmem:[#allocation5 + $0x94] sm:$0xf]
    %v88 = vld [vmem:[#allocation5 + $0x98] sm:$0xf]
    %v89 = vld [vmem:[#allocation5 + $0x9c] sm:$0xf]
    %v90 = vld [vmem:[#allocation5 + $0xa0] sm:$0xf]
    %v91 = vld [vmem:[#allocation5 + $0xa4] sm:$0xf]
    %v92 = vld [vmem:[#allocation5 + $0xa8] sm:$0xf]
    %v93 = vld [vmem:[#allocation5 + $0xac] sm:$0xf]
    %v94 = vld [vmem:[#allocation5 + $0xb0] sm:$0xf]
    %v95 = vld [vmem:[#allocation5 + $0xb4] sm:$0xf]
    %v96 = vld [vmem:[#allocation5 + $0xb8] sm:$0xf]
    %v97 = vld [vmem:[#allocation5 + $0xbc] sm:$0xf]
    %v98 = vld [vmem:[#allocation5 + $0xc0] sm:$0xf]
    %v99 = vld [vmem:[#allocation5 + $0xc4] sm:$0xf]
    %v100 = vld [vmem:[#allocation5 + $0xc8] sm:$0xf]
    %v101 = vld [vmem:[#allocation5 + $0xcc] sm:$0xf]
    %v102 = vld [vmem:[#allocation5 + $0xd0] sm:$0xf]
    %v103 = vld [vmem:[#allocation5 + $0xd4] sm:$0xf]
    %v104 = vld [vmem:[#allocation5 + $0xd8] sm:$0xf]
    %v105 = vld [vmem:[#allocation5 + $0xdc] sm:$0xf]
    %v106 = vld [vmem:[#allocation5 + $0xe0] sm:$0xf]
    %v107 = vld [vmem:[#allocation5 + $0xe4] sm:$0xf]
    %v108 = vld [vmem:[#allocation5 + $0xe8] sm:$0xf]
    %v109 = vld [vmem:[#allocation5 + $0xec] sm:$0xf]
    %v110 = vld [vmem:[#allocation5 + $0xf0] sm:$0xf]
    %v111 = vld [vmem:[#allocation5 + $0xf4] sm:$0xf]
    %v112 = vld [vmem:[#allocation5 + $0xf8] sm:$0xf]
    %v113 = vld [vmem:[#allocation5 + $0xfc] sm:$0xf]
    %v114 = vld [vmem:[#allocation5 + $0x100] sm:$0xf]
    %v115 = vld [vmem:[#allocation5 + $0x104] sm:$0xf]
    %v116 = vld [vmem:[#allocation5 + $0x108] sm:$0xf]
    %v117 = vld [vmem:[#allocation5 + $0x10c] sm:$0xf]
    %v118 = vld [vmem:[#allocation5 + $0x110] sm:$0xf]
    %v119 = vld [vmem:[#allocation5 + $0x114] sm:$0xf]
    %v120 = vld [vmem:[#allocation5 + $0x118] sm:$0xf]
    %v121 = vld [vmem:[#allocation5 + $0x11c] sm:$0xf]
    %v122 = vld [vmem:[#allocation5 + $0x120] sm:$0xf]
    %v123 = vld [vmem:[#allocation5 + $0x124] sm:$0xf]
    %v124 = vld [vmem:[#allocation5 + $0x128] sm:$0xf]
    %v125 = vld [vmem:[#allocation5 + $0x12c] sm:$0xf]
    %v126 = vld [vmem:[#allocation5 + $0x130] sm:$0xf]
    %v127 = vld [vmem:[#allocation5 + $0x134] sm:$0xf]
    %v128 = vld [vmem:[#allocation5 + $0x138] sm:$0xf]
    %v129 = vld [vmem:[#allocation5 + $0x13c] sm:$0xf]
    %v130 = vld [vmem:[#allocation5 + $0x140] sm:$0xf]
    %v131 = vld [vmem:[#allocation5 + $0x144] sm:$0xf]
    %v132 = vld [vmem:[#allocation5 + $0x148] sm:$0xf]
    %v133 = vld [vmem:[#allocation5 + $0x14c] sm:$0xf]
    %v134 = vld [vmem:[#allocation5 + $0x150] sm:$0xf]
    %v135 = vld [vmem:[#allocation5 + $0x154] sm:$0xf]
    %v136 = vld [vmem:[#allocation5 + $0x158] sm:$0xf]
    %v137 = vld [vmem:[#allocation5 + $0x15c] sm:$0xf]
    %v138 = vld [vmem:[#allocation5 + $0x160] sm:$0xf]
    %v139 = vld [vmem:[#allocation5 + $0x164] sm:$0xf]
    %v140 = vld [vmem:[#allocation5 + $0x168] sm:$0xf]
    %v141 = vld [vmem:[#allocation5 + $0x16c] sm:$0xf]
    %v142 = vld [vmem:[#allocation5 + $0x170] sm:$0xf]
    %v143 = vld [vmem:[#allocation5 + $0x174] sm:$0xf]
    %v144 = vld [vmem:[#allocation5 + $0x178] sm:$0xf]
    %v145 = vld [vmem:[#allocation5 + $0x17c] sm:$0xf]
    %v146 = vld [vmem:[#allocation5 + $0x180] sm:$0xf]
    %v147 = vld [vmem:[#allocation5 + $0x184] sm:$0xf]
    %v148 = vld [vmem:[#allocation5 + $0x188] sm:$0xf]
    %v149 = vld [vmem:[#allocation5 + $0x18c] sm:$0xf]
    %v150 = vld [vmem:[#allocation5 + $0x190] sm:$0xf]
    %v151 = vld [vmem:[#allocation5 + $0x194] sm:$0xf]
    %v152 = vld [vmem:[#allocation5 + $0x198] sm:$0xf]
    %v153 = vld [vmem:[#allocation5 + $0x19c] sm:$0xf]
    %v154 = vld [vmem:[#allocation5 + $0x1a0] sm:$0xf]
    %v155 = vld [vmem:[#allocation5 + $0x1a4] sm:$0xf]
    %v156 = vld [vmem:[#allocation5 + $0x1a8] sm:$0xf]
    %v157 = vld [vmem:[#allocation5 + $0x1ac] sm:$0xf]
    %v158 = vld [vmem:[#allocation5 + $0x1b0] sm:$0xf]
    %v159 = vld [vmem:[#allocation5 + $0x1b4] sm:$0xf]
    %v160 = vld [vmem:[#allocation5 + $0x1b8] sm:$0xf]
    %v161 = vld [vmem:[#allocation5 + $0x1bc] sm:$0xf]
    %v162 = vld [vmem:[#allocation5 + $0x1c0] sm:$0xf]
    %v163 = vld [vmem:[#allocation5 + $0x1c4] sm:$0xf]
    %v164 = vld [vmem:[#allocation5 + $0x1c8] sm:$0xf]
    %v165 = vld [vmem:[#allocation5 + $0x1cc] sm:$0xf]
    %v166 = vld [vmem:[#allocation5 + $0x1d0] sm:$0xf]
    %v167 = vld [vmem:[#allocation5 + $0x1d4] sm:$0xf]
    %v168 = vld [vmem:[#allocation5 + $0x1d8] sm:$0xf]
    %v169 = vld [vmem:[#allocation5 + $0x1dc] sm:$0xf]
    %v170 = vld [vmem:[#allocation5 + $0x1e0] sm:$0xf]
    %v171 = vld [vmem:[#allocation5 + $0x1e4] sm:$0xf]
    %v172 = vld [vmem:[#allocation5 + $0x1e8] sm:$0xf]
    %v173 = vld [vmem:[#allocation5 + $0x1ec] sm:$0xf]
    %v174 = vld [vmem:[#allocation5 + $0x1f0] sm:$0xf]
    %v175 = vld [vmem:[#allocation5 + $0x1f4] sm:$0xf]
    %v176 = vld [vmem:[#allocation5 + $0x1f8] sm:$0xf]
    %v177 = vld [vmem:[#allocation5 + $0x1fc] sm:$0xf]
    %v178 = vld [vmem:[#allocation5 + $0x200] sm:$0xf]
    %v179 = vld [vmem:[#allocation5 + $0x204] sm:$0xf]
    %v180 = vld [vmem:[#allocation5 + $0x208] sm:$0xf]
    %v181 = vld [vmem:[#allocation5 + $0x20c] sm:$0xf]
    %v182 = vld [vmem:[#allocation5 + $0x210] sm:$0xf]
    %v183 = vld [vmem:[#allocation5 + $0x214] sm:$0xf]
    %v184 = vld [vmem:[#allocation5 + $0x218] sm:$0xf]
    %v185 = vld [vmem:[#allocation5 + $0x21c] sm:$0xf]
    %v186 = vld [vmem:[#allocation5 + $0x220] sm:$0xf]
    %v187 = vld [vmem:[#allocation5 + $0x224] sm:$0xf]
    %v188 = vld [vmem:[#allocation5 + $0x228] sm:$0xf]
    %v189 = vld [vmem:[#allocation5 + $0x22c] sm:$0xf]
    %v190 = vld [vmem:[#allocation5 + $0x230] sm:$0xf]
    %v191 = vld [vmem:[#allocation5 + $0x234] sm:$0xf]
    %v192 = vld [vmem:[#allocation5 + $0x238] sm:$0xf]
    %v193 = vld [vmem:[#allocation5 + $0x23c] sm:$0xf]
    %v194 = vld [vmem:[#allocation5 + $0x240] sm:$0xf]
    %v195 = vld [vmem:[#allocation5 + $0x244] sm:$0xf]
    %v196 = vld [vmem:[#allocation5 + $0x248] sm:$0xf]
    %v197 = vld [vmem:[#allocation5 + $0x24c] sm:$0xf]
    %v198 = vld [vmem:[#allocation5 + $0x250] sm:$0xf]
    %v199 = vld [vmem:[#allocation5 + $0x254] sm:$0xf]
    %v200 = vld [vmem:[#allocation5 + $0x258] sm:$0xf]
    %v201 = vld [vmem:[#allocation5 + $0x25c] sm:$0xf]
    %v202 = vld [vmem:[#allocation5 + $0x260] sm:$0xf]
    %v203 = vld [vmem:[#allocation5 + $0x264] sm:$0xf]
    %v204 = vld [vmem:[#allocation5 + $0x268] sm:$0xf]
    %v205 = vld [vmem:[#allocation5 + $0x26c] sm:$0xf]
    %v206 = vld [vmem:[#allocation5 + $0x270] sm:$0xf]
    %v207 = vld [vmem:[#allocation5 + $0x274] sm:$0xf]
    %v208 = vld [vmem:[#allocation5 + $0x278] sm:$0xf]
    %v209 = vld [vmem:[#allocation5 + $0x27c] sm:$0xf]
    %v210 = vld [vmem:[#allocation5 + $0x280] sm:$0xf]
    %v211 = vld [vmem:[#allocation5 + $0x284] sm:$0xf]
    %v212 = vld [vmem:[#allocation5 + $0x288] sm:$0xf]
    %v213 = vld [vmem:[#allocation5 + $0x28c] sm:$0xf]
    %v214 = vld [vmem:[#allocation5 + $0x290] sm:$0xf]
    %v215 = vld [vmem:[#allocation5 + $0x294] sm:$0xf]
    %v216 = vld [vmem:[#allocation5 + $0x298] sm:$0xf]
    %v217 = vld [vmem:[#allocation5 + $0x29c] sm:$0xf]
    %v218 = vld [vmem:[#allocation5 + $0x2a0] sm:$0xf]
    %v219 = vld [vmem:[#allocation5 + $0x2a4] sm:$0xf]
    %v220 = vld [vmem:[#allocation5 + $0x2a8] sm:$0xf]
    %v221 = vld [vmem:[#allocation5 + $0x2ac] sm:$0xf]
    %v222 = vld [vmem:[#allocation5 + $0x2b0] sm:$0xf]
    %v223 = vld [vmem:[#allocation5 + $0x2b4] sm:$0xf]
    %v224 = vld [vmem:[#allocation5 + $0x2b8] sm:$0xf]
    %v225 = vld [vmem:[#allocation5 + $0x2bc] sm:$0xf]
    %v226 = vld [vmem:[#allocation5 + $0x2c0] sm:$0xf]
    %v227 = vld [vmem:[#allocation5 + $0x2c4] sm:$0xf]
    %v228 = vld [vmem:[#allocation5 + $0x2c8] sm:$0xf]
    %v229 = vld [vmem:[#allocation5 + $0x2cc] sm:$0xf]
    %v230 = vld [vmem:[#allocation5 + $0x2d0] sm:$0xf]
    %v231 = vld [vmem:[#allocation5 + $0x2d4] sm:$0xf]
    %v232 = vld [vmem:[#allocation5 + $0x2d8] sm:$0xf]
    %v233 = vld [vmem:[#allocation5 + $0x2dc] sm:$0xf]
    %v234 = vld [vmem:[#allocation5 + $0x2e0] sm:$0xf]
    %v235 = vld [vmem:[#allocation5 + $0x2e4] sm:$0xf]
    %v236 = vld [vmem:[#allocation5 + $0x2e8] sm:$0xf]
    %v237 = vld [vmem:[#allocation5 + $0x2ec] sm:$0xf]
    %v238 = vld [vmem:[#allocation5 + $0x2f0] sm:$0xf]
    %v239 = vld [vmem:[#allocation5 + $0x2f4] sm:$0xf]
    %v240 = vld [vmem:[#allocation5 + $0x2f8] sm:$0xf]
    %v241 = vld [vmem:[#allocation5 + $0x2fc] sm:$0xf]
    %v242 = vld [vmem:[#allocation5 + $0x300] sm:$0xf]
    %v243 = vld [vmem:[#allocation5 + $0x304] sm:$0xf]
    %v244 = vld [vmem:[#allocation5 + $0x308] sm:$0xf]
    %v245 = vld [vmem:[#allocation5 + $0x30c] sm:$0xf]
    %v246 = vld [vmem:[#allocation5 + $0x310] sm:$0xf]
    %v247 = vld [vmem:[#allocation5 + $0x314] sm:$0xf]
    %v248 = vld [vmem:[#allocation5 + $0x318] sm:$0xf]
    %v249 = vld [vmem:[#allocation5 + $0x31c] sm:$0xf]
    %v250 = vld [vmem:[#allocation5 + $0x320] sm:$0xf]
    %v251 = vld [vmem:[#allocation5 + $0x324] sm:$0xf]
    %v252 = vld [vmem:[#allocation5 + $0x328] sm:$0xf]
    %v253 = vld [vmem:[#allocation5 + $0x32c] sm:$0xf]
    %v254 = vld [vmem:[#allocation5 + $0x330] sm:$0xf]
    %v255 = vld [vmem:[#allocation5 + $0x334] sm:$0xf]
    %v256 = vld [vmem:[#allocation5 + $0x338] sm:$0xf]
    %v257 = vld [vmem:[#allocation5 + $0x33c] sm:$0xf]
    %v258 = vld [vmem:[#allocation5 + $0x340] sm:$0xf]
    %v259 = vld [vmem:[#allocation5 + $0x344] sm:$0xf]
    %v260 = vld [vmem:[#allocation5 + $0x348] sm:$0xf]
    %v261 = vld [vmem:[#allocation5 + $0x34c] sm:$0xf]
    %v262 = vld [vmem:[#allocation5 + $0x350] sm:$0xf]
    %v263 = vld [vmem:[#allocation5 + $0x354] sm:$0xf]
    %v264 = vld [vmem:[#allocation5 + $0x358] sm:$0xf]
    %v265 = vld [vmem:[#allocation5 + $0x35c] sm:$0xf]
    %v266 = vld [vmem:[#allocation5 + $0x360] sm:$0xf]
    %v267 = vld [vmem:[#allocation5 + $0x364] sm:$0xf]
    %v268 = vld [vmem:[#allocation5 + $0x368] sm:$0xf]
    %v269 = vld [vmem:[#allocation5 + $0x36c] sm:$0xf]
    %v270 = vld [vmem:[#allocation5 + $0x370] sm:$0xf]
    %v271 = vld [vmem:[#allocation5 + $0x374] sm:$0xf]
    %v272 = vld [vmem:[#allocation5 + $0x378] sm:$0xf]
    %v273 = vld [vmem:[#allocation5 + $0x37c] sm:$0xf]
    %v274 = vld [vmem:[#allocation5 + $0x380] sm:$0xf]
    %v275 = vld [vmem:[#allocation5 + $0x384] sm:$0xf]
    %v276 = vld [vmem:[#allocation5 + $0x388] sm:$0xf]
    %v277 = vld [vmem:[#allocation5 + $0x38c] sm:$0xf]
    %v278 = vld [vmem:[#allocation5 + $0x390] sm:$0xf]
    %v279 = vld [vmem:[#allocation5 + $0x394] sm:$0xf]
    %v280 = vld [vmem:[#allocation5 + $0x398] sm:$0xf]
    %v281 = vld [vmem:[#allocation5 + $0x39c] sm:$0xf]
    %v282 = vld [vmem:[#allocation5 + $0x3a0] sm:$0xf]
    %v283 = vld [vmem:[#allocation5 + $0x3a4] sm:$0xf]
    %v284 = vld [vmem:[#allocation5 + $0x3a8] sm:$0xf]
    %v285 = vld [vmem:[#allocation5 + $0x3ac] sm:$0xf]
    %v286 = vld [vmem:[#allocation5 + $0x3b0] sm:$0xf]
    %v287 = vld [vmem:[#allocation5 + $0x3b4] sm:$0xf]
    %v288 = vld [vmem:[#allocation5 + $0x3b8] sm:$0xf]
    %v289 = vld [vmem:[#allocation5 + $0x3bc] sm:$0xf]
    %v290 = vld [vmem:[#allocation5 + $0x3c0] sm:$0xf]
    %v291 = vld [vmem:[#allocation5 + $0x3c4] sm:$0xf]
    %v292 = vld [vmem:[#allocation5 + $0x3c8] sm:$0xf]
    %v293 = vld [vmem:[#allocation5 + $0x3cc] sm:$0xf]
    %v294 = vld [vmem:[#allocation5 + $0x3d0] sm:$0xf]
    %v295 = vld [vmem:[#allocation5 + $0x3d4] sm:$0xf]
    %v296 = vld [vmem:[#allocation5 + $0x3d8] sm:$0xf]
    %v297 = vld [vmem:[#allocation5 + $0x3dc] sm:$0xf]
    %v298 = vld [vmem:[#allocation5 + $0x3e0] sm:$0xf]
    %v299 = vld [vmem:[#allocation5 + $0x3e4] sm:$0xf]
    %v300 = vld [vmem:[#allocation5 + $0x3e8] sm:$0xf]
    %v301 = vld [vmem:[#allocation5 + $0x3ec] sm:$0xf]
    %v302 = vld [vmem:[#allocation5 + $0x3f0] sm:$0xf]
    %v303 = vld [vmem:[#allocation5 + $0x3f4] sm:$0xf]
    %v304 = vld [vmem:[#allocation5 + $0x3f8] sm:$0xf]
    %v305 = vld [vmem:[#allocation5 + $0x3fc] sm:$0xf]
    %v306 = vld [vmem:[%s2] sm:$0x1]
    %v308 = vperm.slane %v306, 0
    %311 = vst [vmem:[#allocation1] ss:$9 sm:$0xff] %v48
    %v312 = vld [vmem:[#allocation1] sm:$0xff]
    %v313 = vld [vmem:[#allocation1 + $0x9] sm:$0xff]
    %v314 = vld [vmem:[#allocation1 + $0x12] sm:$0xff]
    %v315 = vld [vmem:[#allocation1 + $0x1b] sm:$0xff]
    %v316 = vld [vmem:[#allocation1 + $0x24] sm:$0xff]
    %v317 = vld [vmem:[#allocation1 + $0x2d] sm:$0xff]
    %v318 = vld [vmem:[#allocation1 + $0x36] sm:$0xff]
    %v319 = vld [vmem:[#allocation1 + $0x3f] sm:$0xff]
    %321 = vst [vmem:[#allocation1] ss:$9 sm:$0xff] %v49
    %v322 = vld [vmem:[#allocation1] sm:$0xff]
    %v323 = vld [vmem:[#allocation1 + $0x9] sm:$0xff]
    %v324 = vld [vmem:[#allocation1 + $0x12] sm:$0xff]
    %v325 = vld [vmem:[#allocation1 + $0x1b] sm:$0xff]
    %v326 = vld [vmem:[#allocation1 + $0x24] sm:$0xff]
    %v327 = vld [vmem:[#allocation1 + $0x2d] sm:$0xff]
    %v328 = vld [vmem:[#allocation1 + $0x36] sm:$0xff]
    %v329 = vld [vmem:[#allocation1 + $0x3f] sm:$0xff]
    %v602 = vunpack.c.l.b16 %v50
    %v603 = vunpack.c.l.b16 %v51
    %v604 = vunpack.c.l.b16 %v52
    %v605 = vunpack.c.l.b16 %v53
    %v606 = vunpack.c.l.b16 %v54
    %v607 = vunpack.c.l.b16 %v55
    %v608 = vunpack.c.l.b16 %v56
    %v609 = vunpack.c.l.b16 %v57
    %v610 = vunpack.c.l.b16 %v58
    %v611 = vunpack.c.l.b16 %v59
    %v612 = vunpack.c.l.b16 %v60
    %v613 = vunpack.c.l.b16 %v61
    %v614 = vunpack.c.l.b16 %v62
    %v615 = vunpack.c.l.b16 %v63
    %v616 = vunpack.c.l.b16 %v64
    %v617 = vunpack.c.l.b16 %v65
    %v618 = vunpack.c.l.b16 %v66
    %v619 = vunpack.c.l.b16 %v67
    %v620 = vunpack.c.l.b16 %v68
    %v621 = vunpack.c.l.b16 %v69
    %v622 = vunpack.c.l.b16 %v70
    %v623 = vunpack.c.l.b16 %v71
    %v624 = vunpack.c.l.b16 %v72
    %v625 = vunpack.c.l.b16 %v73
    %v626 = vunpack.c.l.b16 %v74
    %v627 = vunpack.c.l.b16 %v75
    %v628 = vunpack.c.l.b16 %v76
    %v629 = vunpack.c.l.b16 %v77
    %v630 = vunpack.c.l.b16 %v78
    %v631 = vunpack.c.l.b16 %v79
    %v632 = vunpack.c.l.b16 %v80
    %v633 = vunpack.c.l.b16 %v81
    %v634 = vunpack.c.l.b16 %v82
    %v635 = vunpack.c.l.b16 %v83
    %v636 = vunpack.c.l.b16 %v84
    %v637 = vunpack.c.l.b16 %v85
    %v638 = vunpack.c.l.b16 %v86
    %v639 = vunpack.c.l.b16 %v87
    %v640 = vunpack.c.l.b16 %v88
    %v641 = vunpack.c.l.b16 %v89
    %v642 = vunpack.c.l.b16 %v90
    %v643 = vunpack.c.l.b16 %v91
    %v644 = vunpack.c.l.b16 %v92
    %v645 = vunpack.c.l.b16 %v93
    %v646 = vunpack.c.l.b16 %v94
    %v647 = vunpack.c.l.b16 %v95
    %v648 = vunpack.c.l.b16 %v96
    %v649 = vunpack.c.l.b16 %v97
    %v650 = vunpack.c.l.b16 %v98
    %v651 = vunpack.c.l.b16 %v99
    %v652 = vunpack.c.l.b16 %v100
    %v653 = vunpack.c.l.b16 %v101
    %v654 = vunpack.c.l.b16 %v102
    %v655 = vunpack.c.l.b16 %v103
    %v656 = vunpack.c.l.b16 %v104
    %v657 = vunpack.c.l.b16 %v105
    %v658 = vunpack.c.l.b16 %v106
    %v659 = vunpack.c.l.b16 %v107
    %v660 = vunpack.c.l.b16 %v108
    %v661 = vunpack.c.l.b16 %v109
    %v662 = vunpack.c.l.b16 %v110
    %v663 = vunpack.c.l.b16 %v111
    %v664 = vunpack.c.l.b16 %v112
    %v665 = vunpack.c.l.b16 %v113
    %v666 = vunpack.c.l.b16 %v114
    %v667 = vunpack.c.l.b16 %v115
    %v668 = vunpack.c.l.b16 %v116
    %v669 = vunpack.c.l.b16 %v117
    %v670 = vunpack.c.l.b16 %v118
    %v671 = vunpack.c.l.b16 %v119
    %v672 = vunpack.c.l.b16 %v120
    %v673 = vunpack.c.l.b16 %v121
    %v674 = vunpack.c.l.b16 %v122
    %v675 = vunpack.c.l.b16 %v123
    %v676 = vunpack.c.l.b16 %v124
    %v677 = vunpack.c.l.b16 %v125
    %v678 = vunpack.c.l.b16 %v126
    %v679 = vunpack.c.l.b16 %v127
    %v680 = vunpack.c.l.b16 %v128
    %v681 = vunpack.c.l.b16 %v129
    %v682 = vunpack.c.l.b16 %v130
    %v683 = vunpack.c.l.b16 %v131
    %v684 = vunpack.c.l.b16 %v132
    %v685 = vunpack.c.l.b16 %v133
    %v686 = vunpack.c.l.b16 %v134
    %v687 = vunpack.c.l.b16 %v135
    %v688 = vunpack.c.l.b16 %v136
    %v689 = vunpack.c.l.b16 %v137
    %v690 = vunpack.c.l.b16 %v138
    %v691 = vunpack.c.l.b16 %v139
    %v692 = vunpack.c.l.b16 %v140
    %v693 = vunpack.c.l.b16 %v141
    %v694 = vunpack.c.l.b16 %v142
    %v695 = vunpack.c.l.b16 %v143
    %v696 = vunpack.c.l.b16 %v144
    %v697 = vunpack.c.l.b16 %v145
    %v698 = vunpack.c.l.b16 %v146
    %v699 = vunpack.c.l.b16 %v147
    %v700 = vunpack.c.l.b16 %v148
    %v701 = vunpack.c.l.b16 %v149
    %v702 = vunpack.c.l.b16 %v150
    %v703 = vunpack.c.l.b16 %v151
    %v704 = vunpack.c.l.b16 %v152
    %v705 = vunpack.c.l.b16 %v153
    %v706 = vunpack.c.l.b16 %v154
    %v707 = vunpack.c.l.b16 %v155
    %v708 = vunpack.c.l.b16 %v156
    %v709 = vunpack.c.l.b16 %v157
    %v710 = vunpack.c.l.b16 %v158
    %v711 = vunpack.c.l.b16 %v159
    %v712 = vunpack.c.l.b16 %v160
    %v713 = vunpack.c.l.b16 %v161
    %v714 = vunpack.c.l.b16 %v162
    %v715 = vunpack.c.l.b16 %v163
    %v716 = vunpack.c.l.b16 %v164
    %v717 = vunpack.c.l.b16 %v165
    %v718 = vunpack.c.l.b16 %v166
    %v719 = vunpack.c.l.b16 %v167
    %v720 = vunpack.c.l.b16 %v168
    %v721 = vunpack.c.l.b16 %v169
    %v722 = vunpack.c.l.b16 %v170
    %v723 = vunpack.c.l.b16 %v171
    %v724 = vunpack.c.l.b16 %v172
    %v725 = vunpack.c.l.b16 %v173
    %v726 = vunpack.c.l.b16 %v174
    %v727 = vunpack.c.l.b16 %v175
    %v728 = vunpack.c.l.b16 %v176
    %v729 = vunpack.c.l.b16 %v177
    %v730 = vunpack.c.l.b16 %v178
    %v731 = vunpack.c.l.b16 %v179
    %v732 = vunpack.c.l.b16 %v180
    %v733 = vunpack.c.l.b16 %v181
    %v734 = vunpack.c.l.b16 %v182
    %v735 = vunpack.c.l.b16 %v183
    %v736 = vunpack.c.l.b16 %v184
    %v737 = vunpack.c.l.b16 %v185
    %v738 = vunpack.c.l.b16 %v186
    %v739 = vunpack.c.l.b16 %v187
    %v740 = vunpack.c.l.b16 %v188
    %v741 = vunpack.c.l.b16 %v189
    %v742 = vunpack.c.l.b16 %v190
    %v743 = vunpack.c.l.b16 %v191
    %v744 = vunpack.c.l.b16 %v192
    %v745 = vunpack.c.l.b16 %v193
    %v746 = vunpack.c.l.b16 %v194
    %v747 = vunpack.c.l.b16 %v195
    %v748 = vunpack.c.l.b16 %v196
    %v749 = vunpack.c.l.b16 %v197
    %v750 = vunpack.c.l.b16 %v198
    %v751 = vunpack.c.l.b16 %v199
    %v752 = vunpack.c.l.b16 %v200
    %v753 = vunpack.c.l.b16 %v201
    %v754 = vunpack.c.l.b16 %v202
    %v755 = vunpack.c.l.b16 %v203
    %v756 = vunpack.c.l.b16 %v204
    %v757 = vunpack.c.l.b16 %v205
    %v758 = vunpack.c.l.b16 %v206
    %v759 = vunpack.c.l.b16 %v207
    %v760 = vunpack.c.l.b16 %v208
    %v761 = vunpack.c.l.b16 %v209
    %v762 = vunpack.c.l.b16 %v210
    %v763 = vunpack.c.l.b16 %v211
    %v764 = vunpack.c.l.b16 %v212
    %v765 = vunpack.c.l.b16 %v213
    %v766 = vunpack.c.l.b16 %v214
    %v767 = vunpack.c.l.b16 %v215
    %v768 = vunpack.c.l.b16 %v216
    %v769 = vunpack.c.l.b16 %v217
    %v770 = vunpack.c.l.b16 %v218
    %v771 = vunpack.c.l.b16 %v219
    %v772 = vunpack.c.l.b16 %v220
    %v773 = vunpack.c.l.b16 %v221
    %v774 = vunpack.c.l.b16 %v222
    %v775 = vunpack.c.l.b16 %v223
    %v776 = vunpack.c.l.b16 %v224
    %v777 = vunpack.c.l.b16 %v225
    %v778 = vunpack.c.l.b16 %v226
    %v779 = vunpack.c.l.b16 %v227
    %v780 = vunpack.c.l.b16 %v228
    %v781 = vunpack.c.l.b16 %v229
    %v782 = vunpack.c.l.b16 %v230
    %v783 = vunpack.c.l.b16 %v231
    %v784 = vunpack.c.l.b16 %v232
    %v785 = vunpack.c.l.b16 %v233
    %v786 = vunpack.c.l.b16 %v234
    %v787 = vunpack.c.l.b16 %v235
    %v788 = vunpack.c.l.b16 %v236
    %v789 = vunpack.c.l.b16 %v237
    %v790 = vunpack.c.l.b16 %v238
    %v791 = vunpack.c.l.b16 %v239
    %v792 = vunpack.c.l.b16 %v240
    %v793 = vunpack.c.l.b16 %v241
    %v794 = vunpack.c.l.b16 %v242
    %v795 = vunpack.c.l.b16 %v243
    %v796 = vunpack.c.l.b16 %v244
    %v797 = vunpack.c.l.b16 %v245
    %v798 = vunpack.c.l.b16 %v246
    %v799 = vunpack.c.l.b16 %v247
    %v800 = vunpack.c.l.b16 %v248
    %v801 = vunpack.c.l.b16 %v249
    %v802 = vunpack.c.l.b16 %v250
    %v803 = vunpack.c.l.b16 %v251
    %v804 = vunpack.c.l.b16 %v252
    %v805 = vunpack.c.l.b16 %v253
    %v806 = vunpack.c.l.b16 %v254
    %v807 = vunpack.c.l.b16 %v255
    %v808 = vunpack.c.l.b16 %v256
    %v809 = vunpack.c.l.b16 %v257
    %v810 = vunpack.c.l.b16 %v258
    %v811 = vunpack.c.l.b16 %v259
    %v812 = vunpack.c.l.b16 %v260
    %v813 = vunpack.c.l.b16 %v261
    %v814 = vunpack.c.l.b16 %v262
    %v815 = vunpack.c.l.b16 %v263
    %v816 = vunpack.c.l.b16 %v264
    %v817 = vunpack.c.l.b16 %v265
    %v818 = vunpack.c.l.b16 %v266
    %v819 = vunpack.c.l.b16 %v267
    %v820 = vunpack.c.l.b16 %v268
    %v821 = vunpack.c.l.b16 %v269
    %v822 = vunpack.c.l.b16 %v270
    %v823 = vunpack.c.l.b16 %v271
    %v824 = vunpack.c.l.b16 %v272
    %v825 = vunpack.c.l.b16 %v273
    %v826 = vunpack.c.l.b16 %v274
    %v827 = vunpack.c.l.b16 %v275
    %v828 = vunpack.c.l.b16 %v276
    %v829 = vunpack.c.l.b16 %v277
    %v830 = vunpack.c.l.b16 %v278
    %v831 = vunpack.c.l.b16 %v279
    %v832 = vunpack.c.l.b16 %v280
    %v833 = vunpack.c.l.b16 %v281
    %v834 = vunpack.c.l.b16 %v282
    %v835 = vunpack.c.l.b16 %v283
    %v836 = vunpack.c.l.b16 %v284
    %v837 = vunpack.c.l.b16 %v285
    %v838 = vunpack.c.l.b16 %v286
    %v839 = vunpack.c.l.b16 %v287
    %v840 = vunpack.c.l.b16 %v288
    %v841 = vunpack.c.l.b16 %v289
    %v842 = vunpack.c.l.b16 %v290
    %v843 = vunpack.c.l.b16 %v291
    %v844 = vunpack.c.l.b16 %v292
    %v845 = vunpack.c.l.b16 %v293
    %v846 = vunpack.c.l.b16 %v294
    %v847 = vunpack.c.l.b16 %v295
    %v848 = vunpack.c.l.b16 %v296
    %v849 = vunpack.c.l.b16 %v297
    %v850 = vunpack.c.l.b16 %v298
    %v851 = vunpack.c.l.b16 %v299
    %v852 = vunpack.c.l.b16 %v300
    %v853 = vunpack.c.l.b16 %v301
    %v854 = vunpack.c.l.b16 %v302
    %v855 = vunpack.c.l.b16 %v303
    %v856 = vunpack.c.l.b16 %v304
    %v857 = vunpack.c.l.b16 %v305
    %v858 = vpack.c.b16 %v603, %v602
    %v859 = vpack.c.b16 %v605, %v604
    %v860 = vpack.c.b16 %v607, %v606
    %v861 = vpack.c.b16 %v609, %v608
    %v862 = vpack.c.b16 %v611, %v610
    %v863 = vpack.c.b16 %v613, %v612
    %v864 = vpack.c.b16 %v615, %v614
    %v865 = vpack.c.b16 %v617, %v616
    %v866 = vpack.c.b16 %v619, %v618
    %v867 = vpack.c.b16 %v621, %v620
    %v868 = vpack.c.b16 %v623, %v622
    %v869 = vpack.c.b16 %v625, %v624
    %v870 = vpack.c.b16 %v627, %v626
    %v871 = vpack.c.b16 %v629, %v628
    %v872 = vpack.c.b16 %v631, %v630
    %v873 = vpack.c.b16 %v633, %v632
    %v874 = vpack.c.b16 %v635, %v634
    %v875 = vpack.c.b16 %v637, %v636
    %v876 = vpack.c.b16 %v639, %v638
    %v877 = vpack.c.b16 %v641, %v640
    %v878 = vpack.c.b16 %v643, %v642
    %v879 = vpack.c.b16 %v645, %v644
    %v880 = vpack.c.b16 %v647, %v646
    %v881 = vpack.c.b16 %v649, %v648
    %v882 = vpack.c.b16 %v651, %v650
    %v883 = vpack.c.b16 %v653, %v652
    %v884 = vpack.c.b16 %v655, %v654
    %v885 = vpack.c.b16 %v657, %v656
    %v886 = vpack.c.b16 %v659, %v658
    %v887 = vpack.c.b16 %v661, %v660
    %v888 = vpack.c.b16 %v663, %v662
    %v889 = vpack.c.b16 %v665, %v664
    %v890 = vpack.c.b16 %v667, %v666
    %v891 = vpack.c.b16 %v669, %v668
    %v892 = vpack.c.b16 %v671, %v670
    %v893 = vpack.c.b16 %v673, %v672
    %v894 = vpack.c.b16 %v675, %v674
    %v895 = vpack.c.b16 %v677, %v676
    %v896 = vpack.c.b16 %v679, %v678
    %v897 = vpack.c.b16 %v681, %v680
    %v898 = vpack.c.b16 %v683, %v682
    %v899 = vpack.c.b16 %v685, %v684
    %v900 = vpack.c.b16 %v687, %v686
    %v901 = vpack.c.b16 %v689, %v688
    %v902 = vpack.c.b16 %v691, %v690
    %v903 = vpack.c.b16 %v693, %v692
    %v904 = vpack.c.b16 %v695, %v694
    %v905 = vpack.c.b16 %v697, %v696
    %v906 = vpack.c.b16 %v699, %v698
    %v907 = vpack.c.b16 %v701, %v700
    %v908 = vpack.c.b16 %v703, %v702
    %v909 = vpack.c.b16 %v705, %v704
    %v910 = vpack.c.b16 %v707, %v706
    %v911 = vpack.c.b16 %v709, %v708
    %v912 = vpack.c.b16 %v711, %v710
    %v913 = vpack.c.b16 %v713, %v712
    %v914 = vpack.c.b16 %v715, %v714
    %v915 = vpack.c.b16 %v717, %v716
    %v916 = vpack.c.b16 %v719, %v718
    %v917 = vpack.c.b16 %v721, %v720
    %v918 = vpack.c.b16 %v723, %v722
    %v919 = vpack.c.b16 %v725, %v724
    %v920 = vpack.c.b16 %v727, %v726
    %v921 = vpack.c.b16 %v729, %v728
    %v922 = vpack.c.b16 %v731, %v730
    %v923 = vpack.c.b16 %v733, %v732
    %v924 = vpack.c.b16 %v735, %v734
    %v925 = vpack.c.b16 %v737, %v736
    %v926 = vpack.c.b16 %v739, %v738
    %v927 = vpack.c.b16 %v741, %v740
    %v928 = vpack.c.b16 %v743, %v742
    %v929 = vpack.c.b16 %v745, %v744
    %v930 = vpack.c.b16 %v747, %v746
    %v931 = vpack.c.b16 %v749, %v748
    %v932 = vpack.c.b16 %v751, %v750
    %v933 = vpack.c.b16 %v753, %v752
    %v934 = vpack.c.b16 %v755, %v754
    %v935 = vpack.c.b16 %v757, %v756
    %v936 = vpack.c.b16 %v759, %v758
    %v937 = vpack.c.b16 %v761, %v760
    %v938 = vpack.c.b16 %v763, %v762
    %v939 = vpack.c.b16 %v765, %v764
    %v940 = vpack.c.b16 %v767, %v766
    %v941 = vpack.c.b16 %v769, %v768
    %v942 = vpack.c.b16 %v771, %v770
    %v943 = vpack.c.b16 %v773, %v772
    %v944 = vpack.c.b16 %v775, %v774
    %v945 = vpack.c.b16 %v777, %v776
    %v946 = vpack.c.b16 %v779, %v778
    %v947 = vpack.c.b16 %v781, %v780
    %v948 = vpack.c.b16 %v783, %v782
    %v949 = vpack.c.b16 %v785, %v784
    %v950 = vpack.c.b16 %v787, %v786
    %v951 = vpack.c.b16 %v789, %v788
    %v952 = vpack.c.b16 %v791, %v790
    %v953 = vpack.c.b16 %v793, %v792
    %v954 = vpack.c.b16 %v795, %v794
    %v955 = vpack.c.b16 %v797, %v796
    %v956 = vpack.c.b16 %v799, %v798
    %v957 = vpack.c.b16 %v801, %v800
    %v958 = vpack.c.b16 %v803, %v802
    %v959 = vpack.c.b16 %v805, %v804
    %v960 = vpack.c.b16 %v807, %v806
    %v961 = vpack.c.b16 %v809, %v808
    %v962 = vpack.c.b16 %v811, %v810
    %v963 = vpack.c.b16 %v813, %v812
    %v964 = vpack.c.b16 %v815, %v814
    %v965 = vpack.c.b16 %v817, %v816
    %v966 = vpack.c.b16 %v819, %v818
    %v967 = vpack.c.b16 %v821, %v820
    %v968 = vpack.c.b16 %v823, %v822
    %v969 = vpack.c.b16 %v825, %v824
    %v970 = vpack.c.b16 %v827, %v826
    %v971 = vpack.c.b16 %v829, %v828
    %v972 = vpack.c.b16 %v831, %v830
    %v973 = vpack.c.b16 %v833, %v832
    %v974 = vpack.c.b16 %v835, %v834
    %v975 = vpack.c.b16 %v837, %v836
    %v976 = vpack.c.b16 %v839, %v838
    %v977 = vpack.c.b16 %v841, %v840
    %v978 = vpack.c.b16 %v843, %v842
    %v979 = vpack.c.b16 %v845, %v844
    %v980 = vpack.c.b16 %v847, %v846
    %v981 = vpack.c.b16 %v849, %v848
    %v982 = vpack.c.b16 %v851, %v850
    %v983 = vpack.c.b16 %v853, %v852
    %v984 = vpack.c.b16 %v855, %v854
    %v985 = vpack.c.b16 %v857, %v856
    %1114 = vmatpush.bf16.msra.mxu0 %v865
    %1115 = vmatpush.bf16.msra.mxu0 %v864
    %1116 = vmatpush.bf16.msra.mxu0 %v863
    %1117 = vmatpush.bf16.msra.mxu0 %v862
    %1118 = vmatpush.bf16.msra.mxu0 %v861
    %1119 = vmatpush.bf16.msra.mxu0 %v860
    %1120 = vmatpush.bf16.msra.mxu0 %v859
    %1121 = vmatpush.bf16.msra.mxu0 %v858
    %1122 = vmatmul.bf16.gmra.mxu0 %v312
    %v1123 = vpop.f32.mrf.mxu0
    %v1124 = vadd.f32 %v308, %v1123
    %v1125 = vpop.f32.mrf.mxu0
    %1126 = vdwg.mxu0
    %1127 = vmatpush.bf16.msra.mxu0 %v873
    %1128 = vmatpush.bf16.msra.mxu0 %v872
    %1129 = vmatpush.bf16.msra.mxu0 %v871
    %1130 = vmatpush.bf16.msra.mxu0 %v870
    %1131 = vmatpush.bf16.msra.mxu0 %v869
    %1132 = vmatpush.bf16.msra.mxu0 %v868
    %1133 = vmatpush.bf16.msra.mxu0 %v867
    %1134 = vmatpush.bf16.msra.mxu0 %v866
    %1135 = vmatmul.bf16.gmra.mxu0 %v313
    %v1136 = vpop.f32.mrf.mxu0
    %v1137 = vadd.f32 %v1124, %v1136
    %v1138 = vpop.f32.mrf.mxu0
    %1139 = vdwg.mxu0
    %1140 = vmatpush.bf16.msra.mxu0 %v881
    %1141 = vmatpush.bf16.msra.mxu0 %v880
    %1142 = vmatpush.bf16.msra.mxu0 %v879
    %1143 = vmatpush.bf16.msra.mxu0 %v878
    %1144 = vmatpush.bf16.msra.mxu0 %v877
    %1145 = vmatpush.bf16.msra.mxu0 %v876
    %1146 = vmatpush.bf16.msra.mxu0 %v875
    %1147 = vmatpush.bf16.msra.mxu0 %v874
    %1148 = vmatmul.bf16.gmra.mxu0 %v314
    %v1149 = vpop.f32.mrf.mxu0
    %v1150 = vadd.f32 %v1137, %v1149
    %v1151 = vpop.f32.mrf.mxu0
    %1152 = vdwg.mxu0
    %1153 = vmatpush.bf16.msra.mxu0 %v889
    %1154 = vmatpush.bf16.msra.mxu0 %v888
    %1155 = vmatpush.bf16.msra.mxu0 %v887
    %1156 = vmatpush.bf16.msra.mxu0 %v886
    %1157 = vmatpush.bf16.msra.mxu0 %v885
    %1158 = vmatpush.bf16.msra.mxu0 %v884
    %1159 = vmatpush.bf16.msra.mxu0 %v883
    %1160 = vmatpush.bf16.msra.mxu0 %v882
    %1161 = vmatmul.bf16.gmra.mxu0 %v315
    %v1162 = vpop.f32.mrf.mxu0
    %v1163 = vadd.f32 %v1150, %v1162
    %v1164 = vpop.f32.mrf.mxu0
    %1165 = vdwg.mxu0
    %1166 = vmatpush.bf16.msra.mxu0 %v897
    %1167 = vmatpush.bf16.msra.mxu0 %v896
    %1168 = vmatpush.bf16.msra.mxu0 %v895
    %1169 = vmatpush.bf16.msra.mxu0 %v894
    %1170 = vmatpush.bf16.msra.mxu0 %v893
    %1171 = vmatpush.bf16.msra.mxu0 %v892
    %1172 = vmatpush.bf16.msra.mxu0 %v891
    %1173 = vmatpush.bf16.msra.mxu0 %v890
    %1174 = vmatmul.bf16.gmra.mxu0 %v316
    %v1175 = vpop.f32.mrf.mxu0
    %v1176 = vadd.f32 %v1163, %v1175
    %v1177 = vpop.f32.mrf.mxu0
    %1178 = vdwg.mxu0
    %1179 = vmatpush.bf16.msra.mxu0 %v905
    %1180 = vmatpush.bf16.msra.mxu0 %v904
    %1181 = vmatpush.bf16.msra.mxu0 %v903
    %1182 = vmatpush.bf16.msra.mxu0 %v902
    %1183 = vmatpush.bf16.msra.mxu0 %v901
    %1184 = vmatpush.bf16.msra.mxu0 %v900
    %1185 = vmatpush.bf16.msra.mxu0 %v899
    %1186 = vmatpush.bf16.msra.mxu0 %v898
    %1187 = vmatmul.bf16.gmra.mxu0 %v317
    %v1188 = vpop.f32.mrf.mxu0
    %v1189 = vadd.f32 %v1176, %v1188
    %v1190 = vpop.f32.mrf.mxu0
    %1191 = vdwg.mxu0
    %1192 = vmatpush.bf16.msra.mxu0 %v913
    %1193 = vmatpush.bf16.msra.mxu0 %v912
    %1194 = vmatpush.bf16.msra.mxu0 %v911
    %1195 = vmatpush.bf16.msra.mxu0 %v910
    %1196 = vmatpush.bf16.msra.mxu0 %v909
    %1197 = vmatpush.bf16.msra.mxu0 %v908
    %1198 = vmatpush.bf16.msra.mxu0 %v907
    %1199 = vmatpush.bf16.msra.mxu0 %v906
    %1200 = vmatmul.bf16.gmra.mxu0 %v318
    %v1201 = vpop.f32.mrf.mxu0
    %v1202 = vadd.f32 %v1189, %v1201
    %v1203 = vpop.f32.mrf.mxu0
    %1204 = vdwg.mxu0
    %1205 = vmatpush.bf16.msra.mxu0 %v921
    %1206 = vmatpush.bf16.msra.mxu0 %v920
    %1207 = vmatpush.bf16.msra.mxu0 %v919
    %1208 = vmatpush.bf16.msra.mxu0 %v918
    %1209 = vmatpush.bf16.msra.mxu0 %v917
    %1210 = vmatpush.bf16.msra.mxu0 %v916
    %1211 = vmatpush.bf16.msra.mxu0 %v915
    %1212 = vmatpush.bf16.msra.mxu0 %v914
    %1213 = vmatmul.bf16.gmra.mxu0 %v319
    %v1214 = vpop.f32.mrf.mxu0
    %v1215 = vadd.f32 %v1202, %v1214
    %v1216 = vpop.f32.mrf.mxu0
    %1217 = vdwg.mxu0
    %1218 = vmatpush.bf16.msra.mxu0 %v929
    %1219 = vmatpush.bf16.msra.mxu0 %v928
    %1220 = vmatpush.bf16.msra.mxu0 %v927
    %1221 = vmatpush.bf16.msra.mxu0 %v926
    %1222 = vmatpush.bf16.msra.mxu0 %v925
    %1223 = vmatpush.bf16.msra.mxu0 %v924
    %1224 = vmatpush.bf16.msra.mxu0 %v923
    %1225 = vmatpush.bf16.msra.mxu0 %v922
    %1226 = vmatmul.bf16.gmra.mxu0 %v322
    %v1227 = vpop.f32.mrf.mxu0
    %v1228 = vadd.f32 %v1215, %v1227
    %v1229 = vpop.f32.mrf.mxu0
    %1230 = vdwg.mxu0
    %1231 = vmatpush.bf16.msra.mxu0 %v937
    %1232 = vmatpush.bf16.msra.mxu0 %v936
    %1233 = vmatpush.bf16.msra.mxu0 %v935
    %1234 = vmatpush.bf16.msra.mxu0 %v934
    %1235 = vmatpush.bf16.msra.mxu0 %v933
    %1236 = vmatpush.bf16.msra.mxu0 %v932
    %1237 = vmatpush.bf16.msra.mxu0 %v931
    %1238 = vmatpush.bf16.msra.mxu0 %v930
    %1239 = vmatmul.bf16.gmra.mxu0 %v323
    %v1240 = vpop.f32.mrf.mxu0
    %v1241 = vadd.f32 %v1228, %v1240
    %v1242 = vpop.f32.mrf.mxu0
    %1243 = vdwg.mxu0
    %1244 = vmatpush.bf16.msra.mxu0 %v945
    %1245 = vmatpush.bf16.msra.mxu0 %v944
    %1246 = vmatpush.bf16.msra.mxu0 %v943
    %1247 = vmatpush.bf16.msra.mxu0 %v942
    %1248 = vmatpush.bf16.msra.mxu0 %v941
    %1249 = vmatpush.bf16.msra.mxu0 %v940
    %1250 = vmatpush.bf16.msra.mxu0 %v939
    %1251 = vmatpush.bf16.msra.mxu0 %v938
    %1252 = vmatmul.bf16.gmra.mxu0 %v324
    %v1253 = vpop.f32.mrf.mxu0
    %v1254 = vadd.f32 %v1241, %v1253
    %v1255 = vpop.f32.mrf.mxu0
    %1256 = vdwg.mxu0
    %1257 = vmatpush.bf16.msra.mxu0 %v953
    %1258 = vmatpush.bf16.msra.mxu0 %v952
    %1259 = vmatpush.bf16.msra.mxu0 %v951
    %1260 = vmatpush.bf16.msra.mxu0 %v950
    %1261 = vmatpush.bf16.msra.mxu0 %v949
    %1262 = vmatpush.bf16.msra.mxu0 %v948
    %1263 = vmatpush.bf16.msra.mxu0 %v947
    %1264 = vmatpush.bf16.msra.mxu0 %v946
    %1265 = vmatmul.bf16.gmra.mxu0 %v325
    %v1266 = vpop.f32.mrf.mxu0
    %v1267 = vadd.f32 %v1254, %v1266
    %v1268 = vpop.f32.mrf.mxu0
    %1269 = vdwg.mxu0
    %1270 = vmatpush.bf16.msra.mxu0 %v961
    %1271 = vmatpush.bf16.msra.mxu0 %v960
    %1272 = vmatpush.bf16.msra.mxu0 %v959
    %1273 = vmatpush.bf16.msra.mxu0 %v958
    %1274 = vmatpush.bf16.msra.mxu0 %v957
    %1275 = vmatpush.bf16.msra.mxu0 %v956
    %1276 = vmatpush.bf16.msra.mxu0 %v955
    %1277 = vmatpush.bf16.msra.mxu0 %v954
    %1278 = vmatmul.bf16.gmra.mxu0 %v326
    %v1279 = vpop.f32.mrf.mxu0
    %v1280 = vadd.f32 %v1267, %v1279
    %v1281 = vpop.f32.mrf.mxu0
    %1282 = vdwg.mxu0
    %1283 = vmatpush.bf16.msra.mxu0 %v969
    %1284 = vmatpush.bf16.msra.mxu0 %v968
    %1285 = vmatpush.bf16.msra.mxu0 %v967
    %1286 = vmatpush.bf16.msra.mxu0 %v966
    %1287 = vmatpush.bf16.msra.mxu0 %v965
    %1288 = vmatpush.bf16.msra.mxu0 %v964
    %1289 = vmatpush.bf16.msra.mxu0 %v963
    %1290 = vmatpush.bf16.msra.mxu0 %v962
    %1291 = vmatmul.bf16.gmra.mxu0 %v327
    %v1292 = vpop.f32.mrf.mxu0
    %v1293 = vadd.f32 %v1280, %v1292
    %v1294 = vpop.f32.mrf.mxu0
    %1295 = vdwg.mxu0
    %1296 = vmatpush.bf16.msra.mxu0 %v977
    %1297 = vmatpush.bf16.msra.mxu0 %v976
    %1298 = vmatpush.bf16.msra.mxu0 %v975
    %1299 = vmatpush.bf16.msra.mxu0 %v974
    %1300 = vmatpush.bf16.msra.mxu0 %v973
    %1301 = vmatpush.bf16.msra.mxu0 %v972
    %1302 = vmatpush.bf16.msra.mxu0 %v971
    %1303 = vmatpush.bf16.msra.mxu0 %v970
    %1304 = vmatmul.bf16.gmra.mxu0 %v328
    %v1305 = vpop.f32.mrf.mxu0
    %v1306 = vadd.f32 %v1293, %v1305
    %v1307 = vpop.f32.mrf.mxu0
    %1308 = vdwg.mxu0
    %1309 = vmatpush.bf16.msra.mxu0 %v985
    %1310 = vmatpush.bf16.msra.mxu0 %v984
    %1311 = vmatpush.bf16.msra.mxu0 %v983
    %1312 = vmatpush.bf16.msra.mxu0 %v982
    %1313 = vmatpush.bf16.msra.mxu0 %v981
    %1314 = vmatpush.bf16.msra.mxu0 %v980
    %1315 = vmatpush.bf16.msra.mxu0 %v979
    %1316 = vmatpush.bf16.msra.mxu0 %v978
    %1317 = vmatmul.bf16.gmra.mxu0 %v329
    %v1318 = vpop.f32.mrf.mxu0
    %v1319 = vadd.f32 %v1306, %v1318
    %v1320 = vpop.f32.mrf.mxu0
    %1321 = vdwg.mxu0
    %vm1322 = vcmask 1041408
    %v1323 = vsel %vm1322, %v1319, -inf
    %1324 = vmax.xlane.f32.xlu0 %v1323
    %v1325 = vpop.xlane.xlu0 %1324
    %v1326 = vsub.f32 %v1319, %v1325
    %v1327 = vmul.f32 %v1326, 1.442695
    %v1328 = vpow.pop %v1327
    %v1329 = vsel %vm1322, %v1328, 0.0
    %1330 = vadd.xlane.f32.xlu0 %v1329
    %v1331 = vpop.xlane.xlu0 %1330
    %v1332 = vlog2.pop %v1331
    %v1333 = vmul.f32 %v1332, 0.6931472
    %v1334 = vadd.f32 %v1333, %v1325
    %v1335 = vlaneseq
    %v1336 = vand.u32 %v1335, 127
    %v1337 = vld [vmem:[%s3] sm:$0x3]
    %1338 = vset.pattern.permute.xlu0 0
    %1339 = vperm.xlu0 %1338, %v1337
    %v1340 = vpop.permute.xlu0 %1339
    %vm1341 = vcmp.eq.s32.totalorder %v1336, %v1340
    %v1342 = vsel %vm1341, 1, 0
    %v1343 = vcvt.s32.f32 %v1342
    %v1344 = vmul.f32 %v1319, %v1343
    %v1345 = vsel %vm1322, %v1344, 0.0
    %1346 = vadd.xlane.f32.xlu0 %v1345
    %v1347 = vpop.xlane.xlu0 %1346
    %v1348 = vsub.f32 %v1334, %v1347
    %vm1349 = vcmp.eq.s32.totalorder %v1336, 4
    %v1350 = vsel %vm1349, %v1348, %v1319
    %1351 = vst [vmem:[#allocation7] sm:$0x3] %v1350
    // Predicated region
    $region26: #{tpu_custom_call.1} parent=1 // pred_check
      _
    $region27: #{tpu_custom_call.1} parent=1 // pred_check_branch
      %1353 = sbr.rel (0) target = $region29
    $region28: #{tpu_custom_call.1} parent=1 // pred_region
      %1355 = vsyncadd [#allocation4], 0
      %s1357 = sshll.u32 [#allocation7], 4
      %s1358 = int_to_ptr.vmem [resolvable:$true] %s1357
      %s1359 = sshll.u32 %s4, 4
      %s1360 = int_to_ptr.hbm [resolvable:$true] %s1359
      %1362 = dma.vmem_to_hbm [thread:$0]  %s1358, 32, %s1360, [#allocation4]
    $region29: #{tpu_custom_call.1} parent=1 // pred_fallthru
      _
    // Predicated region
    $region30: #{tpu_custom_call.1} parent=1 // pred_check
      _
    $region31: #{tpu_custom_call.1} parent=1 // pred_check_branch
      %1364 = sbr.rel (0) target = $region33
    $region32: #{tpu_custom_call.1} parent=1 // pred_region
      %1366 = dma.done [#allocation4], 32
    $region33: #{tpu_custom_call.1} parent=1 // pred_fallthru
      _
    %1367 = vsyncpa [#allocation3], 1
    %1368 = vsyncpa [#allocation6], 1
    %1369 = vsyncpa [#allocation4], 1

</llo_original>
